<compile_context>
chip_gen: v7x
topology: tpu7x:2x2x1
jax: 0.10.0
libtpu: 0.0.40
codegen_flags: <defaults>
</compile_context>

<pallas_src>
import jax
import jax.numpy as jnp
from jax.experimental import pallas as pl
from jax.experimental.pallas import tpu as pltpu

_LANE = 128
_TARGET_TILE_BYTES = 4 * 1024 * 1024   # ~4 MiB/block: in+out, 2-deep -> ~16 MiB VMEM
_VMEM_LIMIT_BYTES = 40 * 1024 * 1024   # headroom under v7x's 64 MiB physical VMEM
_FAST_PATH_BYTES = 1 * 1024 * 1024     # below this, `return x` always wins


def _identity_kernel(x_ref, o_ref):
    # Pure tile copy: the identity forward.
    o_ref[...] = x_ref[...]


def _lane_dense_view(total: int, last_dim: int, sublane: int):
    """Choose a (rows, cols) 2-D view with cols a wide multiple of 128 if possible."""
    best = None
    for cols in (8192, 4096, 2048, 1024, 512, 256, 128):
        if total % cols == 0:
            rows = total // cols
            if best is None:
                best = (rows, cols)
            if rows >= sublane:        # widest lane-dense slab that still fills sublanes
                return rows, cols
    if best is not None:
        return best
    # Fallback: keep the original trailing dim as lanes (full-extent blocks later).
    if last_dim > 0 and total % last_dim == 0:
        return total // last_dim, last_dim
    return 1, total


def _pick_row_tile(rows: int, sublane: int, max_rows: int) -> int:
    """Largest sublane-aligned row tile <= max_rows, preferring exact divisors of rows."""
    if rows <= sublane:
        return rows                    # full-extent small row dim (exempt from (8,128))
    max_rows = max(sublane, min(rows, max_rows))
    max_rows = (max_rows // sublane) * sublane
    # Prefer a tile that divides rows exactly (no ragged / masked last block).
    for tr in range(max_rows, sublane - 1, -sublane):
        if rows % tr == 0:
            return tr
    return max_rows                    # ragged tail (correctly masked) fallback


def sn_identity_forward(x: jax.Array, *, force_kernel: bool = False) -> jax.Array:
    """Identity forward.

    Fast path returns `x` directly (the true zero-cost identity).  The tiled
    Pallas copy is used only for large inputs or when `force_kernel=True`
    (so the kernel path can be exercised end-to-end).
    """
    orig_shape = x.shape
    dtype = x.dtype
    total = int(x.size)

    if total == 0:
        return x
    itemsize = jnp.dtype(dtype).itemsize
    if not force_kernel and total * itemsize < _FAST_PATH_BYTES:
        return x                       # zero-cost identity: no dispatch, no copy

    # Sublane packing: 8 rows/vreg for 4-byte, 16 for 2-byte, 32 for 1-byte dtypes.
    sublane = 8 * max(1, 4 // max(1, itemsize))

    last_dim = orig_shape[-1] if x.ndim >= 1 else 1
    rows, cols = _lane_dense_view(total, last_dim, sublane)
    x2 = x.reshape(rows, cols)

    # Lane (column) tile.  When cols is a multiple of 128 there is never a
    # ragged lane tail (tile_c divides cols); otherwise use the full extent,
    # which is exempt from the (8,128) rule and also avoids masked vst.
    if cols % _LANE == 0:
        max_cols = max(_LANE, _TARGET_TILE_BYTES // max(1, sublane * itemsize))
        tile_c = min(cols, (max_cols // _LANE) * _LANE)
        while cols % tile_c != 0 and tile_c > _LANE:
            tile_c -= _LANE
    else:
        tile_c = cols

    # Sublane (row) tile: sublane-aligned, bounded by the ~4 MiB byte budget,
    # preferring exact divisors of rows.
    max_rows_by_bytes = max(1, _TARGET_TILE_BYTES // max(1, tile_c * itemsize))
    tile_r = _pick_row_tile(rows, sublane, max_rows_by_bytes)

    # v7x has 2 TensorCores: keep >= 2 grid steps along a parallel axis when
    # the data is big enough, so both cores get work.
    if pl.cdiv(rows, tile_r) * pl.cdiv(cols, tile_c) == 1 and rows >= 2 * sublane:
        tile_r = _pick_row_tile(rows, sublane, max(sublane, tile_r // 2))

    grid = (pl.cdiv(rows, tile_r), pl.cdiv(cols, tile_c))

    out = pl.pallas_call(
        _identity_kernel,
        out_shape=jax.ShapeDtypeStruct((rows, cols), dtype),
        grid_spec=pltpu.PrefetchScalarGridSpec(
            num_scalar_prefetch=0,
            grid=grid,
            in_specs=[pl.BlockSpec((tile_r, tile_c), lambda i, j: (i, j))],
            out_specs=pl.BlockSpec((tile_r, tile_c), lambda i, j: (i, j)),
        ),
        compiler_params=pltpu.CompilerParams(
            dimension_semantics=("parallel", "parallel"),
            vmem_limit_bytes=_VMEM_LIMIT_BYTES,
        ),
    )(x2)

    return out.reshape(orig_shape)


class SnIdentity:
    """JAX/Pallas counterpart of parametricSN sn_Identity."""

    def __init__(self, *args, **kwargs):
        self.n_coefficients = 1  # matches the PyTorch module attribute

    def __call__(self, x):
        # Production path: zero-cost identity for the small activations this
        # module sees; the tiled Pallas copy only engages for large inputs.
        return sn_identity_forward(x)


if __name__ == "__main__":
    key = jax.random.PRNGKey(0)
    # Small NCHW activation, consistent with the scattering-network usage.
    x = jax.random.normal(key, (2, 4, 16, 16), dtype=jnp.float32)

    module = SnIdentity()
    y = jax.block_until_ready(module(x))          # fast path: returns x

    # Explicitly exercise the Pallas copy path once (demo input is below the
    # fast-path threshold, so force the kernel to prove it compiles & runs).
    y_k = jax.block_until_ready(sn_identity_forward(x, force_kernel=True))

    assert y.shape == x.shape and y.dtype == x.dtype
    assert bool(jnp.array_equal(y, x))
    assert y_k.shape == x.shape and y_k.dtype == x.dtype
    assert bool(jnp.array_equal(y_k, x))
    print("KERNEL_OK")
</pallas_src>

<mosaic_0001>
module attributes {stable_mosaic.version = 11 : i64} {
  func.func @_identity_kernel(%arg0: i32, %arg1: i32, %arg2: memref<8x256xf32, #tpu.memory_space<vmem>>, %arg3: memref<8x256xf32, #tpu.memory_space<vmem>>) attributes {dimension_semantics = [#tpu.dimension_semantics<parallel>, #tpu.dimension_semantics<parallel>], iteration_bounds = array<i64: 1, 1>, scalar_prefetch = 0 : i64, scratch_operands = 0 : i64, tpu.core_type = #tpu.core_type<tc>, window_params = [{transform_indices = @transform_0, window_bounds = array<i64: 8, 256>}, {transform_indices = @transform_1, window_bounds = array<i64: 8, 256>}]} {
    %c0 = arith.constant 0 : index
    %c0_0 = arith.constant 0 : index
    %0 = vector.load %arg2[%c0, %c0_0] : memref<8x256xf32, #tpu.memory_space<vmem>>, vector<8x256xf32>
    %c0_1 = arith.constant 0 : index
    %c0_2 = arith.constant 0 : index
    %1 = vector.load %arg3[%c0_1, %c0_2] : memref<8x256xf32, #tpu.memory_space<vmem>>, vector<8x256xf32>
    tpu.vector_store %arg3[%c0_1, %c0_2], %0 {strides = array<i32>} : memref<8x256xf32, #tpu.memory_space<vmem>>, vector<8x256xf32>,
    return
  }
  func.func @transform_0(%arg0: i32, %arg1: i32) -> (i32, i32) {
    %c0_i32 = arith.constant 0 : i32
    return %arg0, %arg1 : i32, i32
  }
  func.func @transform_1(%arg0: i32, %arg1: i32) -> (i32, i32) {
    %c0_i32 = arith.constant 0 : i32
    return %arg0, %arg1 : i32, i32
  }
}

</mosaic_0001>

<llo_original>
// kernel: tpu_custom_call.1
$region0: #{tpu_custom_call.1}
  #allocation0 [shape = 'u32[]', space=smem, size = 0x4, offset = 0x4, fixed_abs, tag = 'smem constant byte address 0x4 - core index']
  #allocation1 [shape = 'u32[144,128]{1,0:T(1,128)}', space=vmem, size = 0x12000, scoped, tag = 'internal scratch']
  %s0 = inlined_call_operand.hbm [shape: f32[8,256], index: 0, kind: input, shape index: {}]
  %s1 = inlined_call_operand.hbm [shape: f32[8,256], index: 1, kind: output, shape index: {}]
  %s2 = sld [smem:[#allocation0]]
  $region18: #{tpu_custom_call.1} parent=0
    _
  %s4 = ssub.s32 1, %s2
  %s5 = scalar_select 0, %s4, %s2
  $region1: #{tpu_custom_call.1} parent=0
    #allocation2 [shape = 'u8[8192]{0}', space=vmem, size = 0x2000, scoped, tag = 'input window, operand 0, single buffered']
    #allocation3 [shape = 's32[1]{0}', space=sflag, size = 0x4, scoped, tag = 'scoped memory for tpu_custom_call.1']
    #allocation4 [shape = 's32[1]{0}', space=sflag, size = 0x4, scoped, tag = 'scoped memory for tpu_custom_call.1']
    #allocation5 [shape = 'u8[8192]{0}', space=vmem, size = 0x2000, scoped, tag = 'output window, operand 0, single buffered']
    %6 = vsyncpa [#allocation3], 0
    %7 = vsyncpa [#allocation4], 0
    // Predicated region
    $region2: #{tpu_custom_call.1} parent=1 // pred_check
      _
    $region3: #{tpu_custom_call.1} parent=1 // pred_check_branch
      %9 = sbr.rel (0) target = $region5
    $region4: #{tpu_custom_call.1} parent=1 // pred_region
      %s11 = ssub.s32 256, 256
      %12 = vsyncadd [#allocation3], %s11
      %s14 = sshll.u32 [#allocation2], 4
      %s15 = int_to_ptr.vmem [resolvable:$true] %s14
      %17 = dma.hbm_to_vmem [thread:$0]  %s0, 256, %s15, [#allocation3]
    $region5: #{tpu_custom_call.1} parent=1 // pred_fallthru
      _
    // Predicated region
    $region6: #{tpu_custom_call.1} parent=1 // pred_check
      _
    $region7: #{tpu_custom_call.1} parent=1 // pred_check_branch
      %19 = sbr.rel (0) target = $region9
    $region8: #{tpu_custom_call.1} parent=1 // pred_region
      %20 = dma.done [#allocation3], 256
    $region9: #{tpu_custom_call.1} parent=1 // pred_fallthru
      _
    %v21 = vld [vmem:[#allocation2] sm:$0xff]
    %v22 = vld [vmem:[#allocation2 + $0x8] sm:$0xff]
    %23 = vst [vmem:[#allocation5] sm:$0xff] %v21
    %24 = vst [vmem:[#allocation5 + $0x8] sm:$0xff] %v22
    // Predicated region
    $region10: #{tpu_custom_call.1} parent=1 // pred_check
      _
    $region11: #{tpu_custom_call.1} parent=1 // pred_check_branch
      %26 = sbr.rel (0) target = $region13
    $region12: #{tpu_custom_call.1} parent=1 // pred_region
      %s28 = ssub.s32 256, 256
      %29 = vsyncadd [#allocation4], %s28
      %s31 = sshll.u32 [#allocation5], 4
      %s32 = int_to_ptr.vmem [resolvable:$true] %s31
      %34 = dma.vmem_to_hbm [thread:$0]  %s32, 256, %s1, [#allocation4]
    $region13: #{tpu_custom_call.1} parent=1 // pred_fallthru
      _
    // Predicated region
    $region14: #{tpu_custom_call.1} parent=1 // pred_check
      _
    $region15: #{tpu_custom_call.1} parent=1 // pred_check_branch
      %36 = sbr.rel (0) target = $region17
    $region16: #{tpu_custom_call.1} parent=1 // pred_region
      %37 = dma.done [#allocation4], 256
    $region17: #{tpu_custom_call.1} parent=1 // pred_fallthru
      _
    %38 = vsyncpa [#allocation3], 1
    %39 = vsyncpa [#allocation4], 1

</llo_original>
